<compile_context>
chip_gen: v6e
topology: v6e:2x2x1
jax: 0.10.0
libtpu: 0.0.40
codegen_flags: <defaults>
</compile_context>

<pallas_src>
import functools

import jax
import jax.numpy as jnp
from jax import lax
from jax.experimental import pallas as pl
from jax.experimental.pallas import tpu as pltpu

jax.config.update("jax_default_matmul_precision", "highest")


def _pick_tile(n, unit, cap):
    """Largest tile <= cap that divides n and is a multiple of `unit`;
    falls back to the full extent n (always a legal block size)."""
    if n <= cap or n % unit:
        return n
    t = cap - (cap % unit)
    while t >= unit:
        if n % t == 0:
            return t
        t -= unit
    return n


# ----------------------------------------------------------------------------
# Kernel 1: fused pairwise-distance + k-NN selection.
# dist[q, :] is computed per query tile as one 8-wide contraction on
# pre-packed augmented operands; the k smallest are selected in-kernel with
# k rounds of (min -> smallest-index-of-min -> mask).  The full B x N x N
# distance matrix never touches HBM.
# ----------------------------------------------------------------------------
def _knn_kernel(aq_ref, bk_ref, idx_ref, *, k):
    a = aq_ref[0]                                             # (tq, 8)
    bmat = bk_ref[0]                                          # (N, 8)
    d = lax.dot_general(a, bmat, (((1,), (1,)), ((), ())),
                        preferred_element_type=jnp.float32)   # (tq, N)
    n_keys = d.shape[1]
    col = lax.broadcasted_iota(jnp.int32, d.shape, 1).astype(jnp.float32)
    big = jnp.float32(1e30)
    cols = []
    for _ in range(k):
        m = jnp.min(d, axis=1, keepdims=True)                 # (tq, 1)
        # smallest column index among the (tied) minima -> deterministic
        sel = jnp.min(jnp.where(d <= m, col, jnp.float32(n_keys)),
                      axis=1, keepdims=True)                  # (tq, 1) float idx
        cols.append(sel)
        d = jnp.where(col == sel, big, d)                     # mask selected entry
    idx_ref[0] = jnp.concatenate(cols, axis=1).astype(jnp.int32)   # (tq, k)


def knn_pallas(xyz, k):
    B, N, _ = xyz.shape
    assert k <= N
    sq = jnp.sum(xyz * xyz, axis=-1, keepdims=True)
    one = jnp.ones_like(sq)
    pad = jnp.zeros((B, N, 3), xyz.dtype)
    # dist = |q|^2 + |k|^2 - 2 q.k  as a single 8-wide contraction (pre-packed,
    # zero-padded to 8 cols -> sublane-aligned, no in-kernel squares/concats).
    a_aug = jnp.concatenate([-2.0 * xyz, sq, one, pad], axis=-1)   # (B, N, 8)
    b_aug = jnp.concatenate([xyz, one, sq, pad], axis=-1)          # (B, N, 8)
    tq = _pick_tile(N, 8, 512)
    return pl.pallas_call(
        functools.partial(_knn_kernel, k=k),
        grid=(B, N // tq),
        in_specs=[pl.BlockSpec((1, tq, 8), lambda b, i: (b, i, 0)),
                  pl.BlockSpec((1, N, 8), lambda b, i: (b, 0, 0))],
        out_specs=pl.BlockSpec((1, tq, k), lambda b, i: (b, i, 0)),
        out_shape=jax.ShapeDtypeStruct((B, N, k), jnp.int32),
        compiler_params=pltpu.CompilerParams(
            dimension_semantics=("parallel", "parallel"),
            vmem_limit_bytes=32 * 1024 * 1024),
    )(a_aug, b_aug)


# ----------------------------------------------------------------------------
# Kernel 2: the transformer block, grid = (batch, query-row tiles)
# ----------------------------------------------------------------------------
def _transformer_block_kernel(
    idx_sref,                                     # SMEM scalar prefetch: (B*N*K,) int32
    q_ref, cat_ref, xyz_ref, feat_ref,
    wd1_ref, bd1_ref, wd2_ref, bd2_ref,
    wg1_ref, bg1_ref, wg2_ref, bg2_ref,
    w2_ref, b2_ref, ws1_ref, bs1_ref, ws2_ref, bs2_ref,
    res_ref, attn_ref,
    gath_ref, *, k):
    b = pl.program_id(0)
    i = pl.program_id(1)
    n_full = cat_ref.shape[1]
    tq = q_ref.shape[1]
    m = q_ref.shape[2]
    kt = k * tq

    def dot(x, w):
        return jnp.dot(x, w, preferred_element_type=jnp.float32)

    # ---- real row gather (no one-hot matmul): gath row r = j*tq + t holds
    #      cat[knn_idx[b, i*tq + t, j]]  (neighbour-major ordering).
    base = (b * n_full + i * tq) * k
    def gather_one(r, carry):
        j = r // tq
        t = r - j * tq
        src = idx_sref[base + t * k + j]
        gath_ref[pl.ds(r, 1), :] = cat_ref[0, pl.ds(src, 1), :]
        return carry
    lax.fori_loop(0, kt, gather_one, 0)
    # TODO(synk): batched DMA gather for large K*tq (per-row copies are
    #             vld/vst-slot bound at production sizes).

    q_rows = q_ref[0]                             # (tq, m)
    xyz_rows = xyz_ref[0]                         # (tq, 3)
    feat_rows = feat_ref[0]                       # (tq, p)

    g = gath_ref[...]                             # (kt, 2m+3)
    k_all = g[:, :m]                              # (kt, m)
    v_all = g[:, m:2 * m]                         # (kt, m)
    nxyz = g[:, 2 * m:2 * m + 3]                  # (kt, 3)

    def rows(arr, j):                             # neighbour j's (tq, .) block
        return arr[j * tq:(j + 1) * tq, :]

    # ---- fc_delta batched over all K neighbours; q/xyz broadcasts are fused
    #      into the per-neighbour subtracts (no K-fold repeat copies).
    rel = jnp.concatenate([xyz_rows - rows(nxyz, j) for j in range(k)], axis=0)
    h = jnp.maximum(dot(rel, wd1_ref[...]) + bd1_ref[...], 0.0)
    pos = dot(h, wd2_ref[...]) + bd2_ref[...]     # (kt, m)

    # ---- fc_gamma batched over all K neighbours
    gin = jnp.concatenate(
        [q_rows - rows(k_all, j) + rows(pos, j) for j in range(k)], axis=0)
    h2 = jnp.maximum(dot(gin, wg1_ref[...]) + bg1_ref[...], 0.0)
    scale = jnp.float32(1.0 / (m ** 0.5))
    pre = (dot(h2, wg2_ref[...]) + bg2_ref[...]) * scale          # (kt, m)

    # ---- softmax over the K (neighbour) axis + weighted sum of (v + pos).
    # TODO(synk): chunk K (online softmax) for v7x 64 MiB VMEM at large K*M.
    mx = rows(pre, 0)
    for j in range(1, k):
        mx = jnp.maximum(mx, rows(pre, j))
    e_list = [jnp.exp(rows(pre, j) - mx) for j in range(k)]
    den = e_list[0]
    for j in range(1, k):
        den = den + e_list[j]
    inv = 1.0 / den                               # exact recip keeps 1e-4 parity

    acc = e_list[0] * (rows(v_all, 0) + rows(pos, 0))
    for j in range(1, k):
        acc = acc + e_list[j] * (rows(v_all, j) + rows(pos, j))
    x_r = acc * inv                               # (tq, m)

    # ONE lane-dense store of the normalised attention slab (tq, k*m)
    attn_ref[0] = jnp.concatenate([e * inv for e in e_list], axis=1)

    # ---- fc2 + fc_sub + residual
    x_r2 = dot(x_r, w2_ref[...]) + b2_ref[...]    # (tq, p)
    sub = feat_rows - x_r2
    h3 = jnp.maximum(dot(sub, ws1_ref[...]) + bs1_ref[...], 0.0)
    res_ref[0] = dot(h3, ws2_ref[...]) + bs2_ref[...] + feat_rows


def transformer_block_pallas(params, xyz, features, k, row_tile=None):
    B, N, _ = xyz.shape
    P = features.shape[-1]
    M = params["w_qs"].shape[0]

    # fused k-NN (no B*N*N matrix in HBM, no wrapper top_k)
    knn_idx = knn_pallas(xyz, k)                  # (B, N, k) int32

    if row_tile is None:
        row_tile = _pick_tile(N, 8, 256)
    assert N % row_tile == 0 and (row_tile % 8 == 0 or row_tile == N)

    t = lambda w: jnp.asarray(w).T                # torch (out,in) -> (in,out)
    b2d = lambda v: jnp.asarray(v).reshape(1, -1)

    # Hoisted full-N projections (plain XLA, reviewer-sanctioned): computed
    # once, so the kernel has no per-tile fc1/wq recompute, no cross-row-tile
    # scratch dependency, and both grid axes can be 'parallel' (megacore).
    x = features @ t(params["fc1_w"]) + params["fc1_b"]
    q = x @ t(params["w_qs"])                                          # (B,N,M)
    cat = jnp.concatenate([x @ t(params["w_ks"]),
                           x @ t(params["w_vs"]),
                           xyz], axis=-1)                              # (B,N,2M+3)

    weight_args = (
        t(params["fc_delta0_w"]), b2d(params["fc_delta0_b"]),
        t(params["fc_delta2_w"]), b2d(params["fc_delta2_b"]),
        t(params["fc_gamma0_w"]), b2d(params["fc_gamma0_b"]),
        t(params["fc_gamma2_w"]), b2d(params["fc_gamma2_b"]),
        t(params["fc2_w"]), b2d(params["fc2_b"]),
        t(params["fc_sub0_w"]), b2d(params["fc_sub0_b"]),
        t(params["fc_sub2_w"]), b2d(params["fc_sub2_b"]),
    )
    # TODO(synk): single-buffer / pack the constant weight blocks (v7x VMEM headroom).

    def full_spec(a):
        nd = a.ndim
        return pl.BlockSpec(a.shape, lambda b_, i_, idx_, _nd=nd: (0,) * _nd)

    in_specs = [
        pl.BlockSpec((1, row_tile, M), lambda b_, i_, idx_: (b_, i_, 0)),      # q rows
        pl.BlockSpec((1, N, 2 * M + 3), lambda b_, i_, idx_: (b_, 0, 0)),      # cat (full N, resident)
        pl.BlockSpec((1, row_tile, 3), lambda b_, i_, idx_: (b_, i_, 0)),      # xyz rows
        pl.BlockSpec((1, row_tile, P), lambda b_, i_, idx_: (b_, i_, 0)),      # feature rows
    ] + [full_spec(a) for a in weight_args]

    out_shape = (jax.ShapeDtypeStruct((B, N, P), jnp.float32),
                 jax.ShapeDtypeStruct((B, N, k * M), jnp.float32))
    out_specs = (pl.BlockSpec((1, row_tile, P), lambda b_, i_, idx_: (b_, i_, 0)),
                 pl.BlockSpec((1, row_tile, k * M), lambda b_, i_, idx_: (b_, i_, 0)))

    grid_spec = pltpu.PrefetchScalarGridSpec(
        num_scalar_prefetch=1,                    # knn_idx (flattened) -> SMEM
        grid=(B, N // row_tile),
        in_specs=in_specs,
        out_specs=out_specs,
        scratch_shapes=[pltpu.VMEM((k * row_tile, 2 * M + 3), jnp.float32)],
    )

    res, attn_flat = pl.pallas_call(
        functools.partial(_transformer_block_kernel, k=k),
        grid_spec=grid_spec,
        out_shape=out_shape,
        compiler_params=pltpu.CompilerParams(
            dimension_semantics=("parallel", "parallel"),
            vmem_limit_bytes=48 * 1024 * 1024),   # <= v7x 64 MiB physical
    )(knn_idx.reshape(-1), q, cat, xyz, features, *weight_args)

    # Free reshape (same memory layout) — lane-dense slab -> (B, N, K, M).
    attn = attn_flat.reshape(B, N, k, M)
    return res, attn, knn_idx


# ----------------------------------------------------------------------------
# Pure-JAX reference (mirrors the PyTorch forward) for correctness checking
# ----------------------------------------------------------------------------
def _gather(points, idx):          # index_points: [B,N,C], [B,N,K] -> [B,N,K,C]
    return jax.vmap(lambda p, i: p[i])(points, idx)


def reference_forward(params, xyz, features, knn_idx):
    def lin(x, w, b=None):
        y = x @ w.T
        return y if b is None else y + b

    x_in = features
    x = lin(features, params["fc1_w"], params["fc1_b"])
    q = lin(x, params["w_qs"])
    kk = _gather(lin(x, params["w_ks"]), knn_idx)
    v = _gather(lin(x, params["w_vs"]), knn_idx)
    knn_xyz = _gather(xyz, knn_idx)

    rel = xyz[:, :, None, :] - knn_xyz
    pos = lin(jax.nn.relu(lin(rel, params["fc_delta0_w"], params["fc_delta0_b"])),
              params["fc_delta2_w"], params["fc_delta2_b"])
    attn_pre = lin(jax.nn.relu(lin(q[:, :, None, :] - kk + pos,
                                   params["fc_gamma0_w"], params["fc_gamma0_b"])),
                   params["fc_gamma2_w"], params["fc_gamma2_b"])
    attn = jax.nn.softmax(attn_pre / (kk.shape[-1] ** 0.5), axis=-2)
    x_r = jnp.einsum('bmnf,bmnf->bmf', attn, v + pos)
    x_r = lin(x_r, params["fc2_w"], params["fc2_b"])
    res = lin(jax.nn.relu(lin(x_in - x_r, params["fc_sub0_w"], params["fc_sub0_b"])),
              params["fc_sub2_w"], params["fc_sub2_b"]) + x_in
    return res, attn


# ----------------------------------------------------------------------------
def init_params(key, d_points, d_model):
    ks = iter(jax.random.split(key, 32))
    w = lambda shape: jax.random.normal(next(ks), shape, jnp.float32) * 0.1
    b = lambda n: jax.random.normal(next(ks), (n,), jnp.float32) * 0.05
    return dict(
        fc1_w=w((d_model, d_points)), fc1_b=b(d_model),
        fc2_w=w((d_points, d_model)), fc2_b=b(d_points),
        fc_delta0_w=w((d_model, 3)), fc_delta0_b=b(d_model),
        fc_delta2_w=w((d_model, d_model)), fc_delta2_b=b(d_model),
        fc_gamma0_w=w((d_model, d_model)), fc_gamma0_b=b(d_model),
        fc_gamma2_w=w((d_model, d_model)), fc_gamma2_b=b(d_model),
        w_qs=w((d_model, d_model)), w_ks=w((d_model, d_model)), w_vs=w((d_model, d_model)),
        fc_sub0_w=w((d_points, d_points)), fc_sub0_b=b(d_points),
        fc_sub2_w=w((d_points, d_points)), fc_sub2_b=b(d_points),
    )


if __name__ == "__main__":
    B, N, D_POINTS, D_MODEL, K = 2, 16, 32, 32, 8

    key = jax.random.PRNGKey(0)
    kp, kx, kf = jax.random.split(key, 3)
    params = init_params(kp, D_POINTS, D_MODEL)
    xyz = jax.random.normal(kx, (B, N, 3), jnp.float32)
    features = jax.random.normal(kf, (B, N, D_POINTS), jnp.float32)

    # row_tile=8 exercises the multi-row-tile path (grid = (B, 2)) including
    # the SMEM-indexed gather with non-zero row offsets.
    res, attn, knn_idx = transformer_block_pallas(params, xyz, features, K, row_tile=8)
    res = jax.block_until_ready(res)
    attn = jax.block_until_ready(attn)

    res_ref, attn_ref = reference_forward(params, xyz, features, knn_idx)
    assert res.shape == (B, N, D_POINTS) and attn.shape == (B, N, K, D_MODEL)
    assert jnp.allclose(res, res_ref, atol=1e-4, rtol=1e-4)
    assert jnp.allclose(attn, attn_ref, atol=1e-4, rtol=1e-4)

    print("KERNEL_OK")
</pallas_src>

<mosaic_0001>
module attributes {stable_mosaic.version = 11 : i64} {
  func.func @_knn_kernel(%arg0: i32, %arg1: i32, %arg2: memref<1x16x8xf32, #tpu.memory_space<vmem>>, %arg3: memref<1x16x8xf32, #tpu.memory_space<vmem>>, %arg4: memref<1x16x8xi32, #tpu.memory_space<vmem>>) attributes {dimension_semantics = [#tpu.dimension_semantics<parallel>, #tpu.dimension_semantics<parallel>], iteration_bounds = array<i64: 2, 1>, scalar_prefetch = 0 : i64, scratch_operands = 0 : i64, tpu.core_type = #tpu.core_type<tc>, window_params = [{transform_indices = @transform_0, window_bounds = array<i64: 1, 16, 8>}, {transform_indices = @transform_1, window_bounds = array<i64: 1, 16, 8>}, {transform_indices = @transform_2, window_bounds = array<i64: 1, 16, 8>}]} {
    %c0 = arith.constant 0 : index
    %c0_0 = arith.constant 0 : index
    %c0_1 = arith.constant 0 : index
    %0 = vector.load %arg2[%c0, %c0_0, %c0_1] : memref<1x16x8xf32, #tpu.memory_space<vmem>>, vector<1x16x8xf32>
    %1 = vector.shape_cast %0 : vector<1x16x8xf32> to vector<16x8xf32>
    %c0_2 = arith.constant 0 : index
    %c0_3 = arith.constant 0 : index
    %c0_4 = arith.constant 0 : index
    %2 = vector.load %arg3[%c0_2, %c0_3, %c0_4] : memref<1x16x8xf32, #tpu.memory_space<vmem>>, vector<1x16x8xf32>
    %3 = vector.shape_cast %2 : vector<1x16x8xf32> to vector<16x8xf32>
    %cst = arith.constant dense<0.000000e+00> : vector<16x16xf32>
    %4 = tpu.matmul %1, %3, %cst {dimension_numbers = #tpu.dot_dimension_numbers<[1], [1], [0], [0], [0, 0, 1, 0], [], []>, precision = #tpu.contract_precision<fp32>} : vector<16x8xf32>, vector<16x8xf32>, vector<16x16xf32> -> vector<16x16xf32>
    %5 = tpu.iota {dimensions = array<i32: 1>} : vector<16x16xi32>
    %6 = arith.sitofp %5 : vector<16x16xi32> to vector<16x16xf32>
    %cst_5 = arith.constant dense<0x7F800000> : vector<16xf32>
    %7 = vector.multi_reduction <minimumf>, %4, %cst_5 [1] : vector<16x16xf32> to vector<16xf32>
    %8 = vector.shape_cast %7 : vector<16xf32> to vector<16x1xf32>
    %9 = vector.broadcast %8 : vector<16x1xf32> to vector<16x16xf32>
    %10 = arith.cmpf ole, %4, %9 : vector<16x16xf32>
    %cst_6 = arith.constant 1.600000e+01 : f32
    %11 = vector.broadcast %cst_6 : f32 to vector<16x16xf32>
    %12 = arith.select %10, %6, %11 : vector<16x16xi1>, vector<16x16xf32>
    %cst_7 = arith.constant dense<0x7F800000> : vector<16xf32>
    %13 = vector.multi_reduction <minimumf>, %12, %cst_7 [1] : vector<16x16xf32> to vector<16xf32>
    %14 = vector.shape_cast %13 : vector<16xf32> to vector<16x1xf32>
    %15 = vector.broadcast %14 : vector<16x1xf32> to vector<16x16xf32>
    %16 = arith.cmpf oeq, %6, %15 : vector<16x16xf32>
    %cst_8 = arith.constant 1.000000e+30 : f32
    %17 = vector.broadcast %cst_8 : f32 to vector<16x16xf32>
    %18 = arith.select %16, %17, %4 : vector<16x16xi1>, vector<16x16xf32>
    %cst_9 = arith.constant dense<0x7F800000> : vector<16xf32>
    %19 = vector.multi_reduction <minimumf>, %18, %cst_9 [1] : vector<16x16xf32> to vector<16xf32>
    %20 = vector.shape_cast %19 : vector<16xf32> to vector<16x1xf32>
    %21 = vector.broadcast %20 : vector<16x1xf32> to vector<16x16xf32>
    %22 = arith.cmpf ole, %18, %21 : vector<16x16xf32>
    %cst_10 = arith.constant 1.600000e+01 : f32
    %23 = vector.broadcast %cst_10 : f32 to vector<16x16xf32>
    %24 = arith.select %22, %6, %23 : vector<16x16xi1>, vector<16x16xf32>
    %cst_11 = arith.constant dense<0x7F800000> : vector<16xf32>
    %25 = vector.multi_reduction <minimumf>, %24, %cst_11 [1] : vector<16x16xf32> to vector<16xf32>
    %26 = vector.shape_cast %25 : vector<16xf32> to vector<16x1xf32>
    %27 = vector.broadcast %26 : vector<16x1xf32> to vector<16x16xf32>
    %28 = arith.cmpf oeq, %6, %27 : vector<16x16xf32>
    %cst_12 = arith.constant 1.000000e+30 : f32
    %29 = vector.broadcast %cst_12 : f32 to vector<16x16xf32>
    %30 = arith.select %28, %29, %18 : vector<16x16xi1>, vector<16x16xf32>
    %cst_13 = arith.constant dense<0x7F800000> : vector<16xf32>
    %31 = vector.multi_reduction <minimumf>, %30, %cst_13 [1] : vector<16x16xf32> to vector<16xf32>
    %32 = vector.shape_cast %31 : vector<16xf32> to vector<16x1xf32>
    %33 = vector.broadcast %32 : vector<16x1xf32> to vector<16x16xf32>
    %34 = arith.cmpf ole, %30, %33 : vector<16x16xf32>
    %cst_14 = arith.constant 1.600000e+01 : f32
    %35 = vector.broadcast %cst_14 : f32 to vector<16x16xf32>
    %36 = arith.select %34, %6, %35 : vector<16x16xi1>, vector<16x16xf32>
    %cst_15 = arith.constant dense<0x7F800000> : vector<16xf32>
    %37 = vector.multi_reduction <minimumf>, %36, %cst_15 [1] : vector<16x16xf32> to vector<16xf32>
    %38 = vector.shape_cast %37 : vector<16xf32> to vector<16x1xf32>
    %39 = vector.broadcast %38 : vector<16x1xf32> to vector<16x16xf32>
    %40 = arith.cmpf oeq, %6, %39 : vector<16x16xf32>
    %cst_16 = arith.constant 1.000000e+30 : f32
    %41 = vector.broadcast %cst_16 : f32 to vector<16x16xf32>
    %42 = arith.select %40, %41, %30 : vector<16x16xi1>, vector<16x16xf32>
    %cst_17 = arith.constant dense<0x7F800000> : vector<16xf32>
    %43 = vector.multi_reduction <minimumf>, %42, %cst_17 [1] : vector<16x16xf32> to vector<16xf32>
    %44 = vector.shape_cast %43 : vector<16xf32> to vector<16x1xf32>
    %45 = vector.broadcast %44 : vector<16x1xf32> to vector<16x16xf32>
    %46 = arith.cmpf ole, %42, %45 : vector<16x16xf32>
    %cst_18 = arith.constant 1.600000e+01 : f32
    %47 = vector.broadcast %cst_18 : f32 to vector<16x16xf32>
    %48 = arith.select %46, %6, %47 : vector<16x16xi1>, vector<16x16xf32>
    %cst_19 = arith.constant dense<0x7F800000> : vector<16xf32>
    %49 = vector.multi_reduction <minimumf>, %48, %cst_19 [1] : vector<16x16xf32> to vector<16xf32>
    %50 = vector.shape_cast %49 : vector<16xf32> to vector<16x1xf32>
    %51 = vector.broadcast %50 : vector<16x1xf32> to vector<16x16xf32>
    %52 = arith.cmpf oeq, %6, %51 : vector<16x16xf32>
    %cst_20 = arith.constant 1.000000e+30 : f32
    %53 = vector.broadcast %cst_20 : f32 to vector<16x16xf32>
    %54 = arith.select %52, %53, %42 : vector<16x16xi1>, vector<16x16xf32>
    %cst_21 = arith.constant dense<0x7F800000> : vector<16xf32>
    %55 = vector.multi_reduction <minimumf>, %54, %cst_21 [1] : vector<16x16xf32> to vector<16xf32>
    %56 = vector.shape_cast %55 : vector<16xf32> to vector<16x1xf32>
    %57 = vector.broadcast %56 : vector<16x1xf32> to vector<16x16xf32>
    %58 = arith.cmpf ole, %54, %57 : vector<16x16xf32>
    %cst_22 = arith.constant 1.600000e+01 : f32
    %59 = vector.broadcast %cst_22 : f32 to vector<16x16xf32>
    %60 = arith.select %58, %6, %59 : vector<16x16xi1>, vector<16x16xf32>
    %cst_23 = arith.constant dense<0x7F800000> : vector<16xf32>
    %61 = vector.multi_reduction <minimumf>, %60, %cst_23 [1] : vector<16x16xf32> to vector<16xf32>
    %62 = vector.shape_cast %61 : vector<16xf32> to vector<16x1xf32>
    %63 = vector.broadcast %62 : vector<16x1xf32> to vector<16x16xf32>
    %64 = arith.cmpf oeq, %6, %63 : vector<16x16xf32>
    %cst_24 = arith.constant 1.000000e+30 : f32
    %65 = vector.broadcast %cst_24 : f32 to vector<16x16xf32>
    %66 = arith.select %64, %65, %54 : vector<16x16xi1>, vector<16x16xf32>
    %cst_25 = arith.constant dense<0x7F800000> : vector<16xf32>
    %67 = vector.multi_reduction <minimumf>, %66, %cst_25 [1] : vector<16x16xf32> to vector<16xf32>
    %68 = vector.shape_cast %67 : vector<16xf32> to vector<16x1xf32>
    %69 = vector.broadcast %68 : vector<16x1xf32> to vector<16x16xf32>
    %70 = arith.cmpf ole, %66, %69 : vector<16x16xf32>
    %cst_26 = arith.constant 1.600000e+01 : f32
    %71 = vector.broadcast %cst_26 : f32 to vector<16x16xf32>
    %72 = arith.select %70, %6, %71 : vector<16x16xi1>, vector<16x16xf32>
    %cst_27 = arith.constant dense<0x7F800000> : vector<16xf32>
    %73 = vector.multi_reduction <minimumf>, %72, %cst_27 [1] : vector<16x16xf32> to vector<16xf32>
    %74 = vector.shape_cast %73 : vector<16xf32> to vector<16x1xf32>
    %75 = vector.broadcast %74 : vector<16x1xf32> to vector<16x16xf32>
    %76 = arith.cmpf oeq, %6, %75 : vector<16x16xf32>
    %cst_28 = arith.constant 1.000000e+30 : f32
    %77 = vector.broadcast %cst_28 : f32 to vector<16x16xf32>
    %78 = arith.select %76, %77, %66 : vector<16x16xi1>, vector<16x16xf32>
    %cst_29 = arith.constant dense<0x7F800000> : vector<16xf32>
    %79 = vector.multi_reduction <minimumf>, %78, %cst_29 [1] : vector<16x16xf32> to vector<16xf32>
    %80 = vector.shape_cast %79 : vector<16xf32> to vector<16x1xf32>
    %81 = vector.broadcast %80 : vector<16x1xf32> to vector<16x16xf32>
    %82 = arith.cmpf ole, %78, %81 : vector<16x16xf32>
    %cst_30 = arith.constant 1.600000e+01 : f32
    %83 = vector.broadcast %cst_30 : f32 to vector<16x16xf32>
    %84 = arith.select %82, %6, %83 : vector<16x16xi1>, vector<16x16xf32>
    %cst_31 = arith.constant dense<0x7F800000> : vector<16xf32>
    %85 = vector.multi_reduction <minimumf>, %84, %cst_31 [1] : vector<16x16xf32> to vector<16xf32>
    %86 = vector.shape_cast %85 : vector<16xf32> to vector<16x1xf32>
    %87 = vector.broadcast %86 : vector<16x1xf32> to vector<16x16xf32>
    %88 = arith.cmpf oeq, %6, %87 : vector<16x16xf32>
    %cst_32 = arith.constant 1.000000e+30 : f32
    %89 = vector.broadcast %cst_32 : f32 to vector<16x16xf32>
    %90 = arith.select %88, %89, %78 : vector<16x16xi1>, vector<16x16xf32>
    %cst_33 = arith.constant dense<0x7F800000> : vector<16xf32>
    %91 = vector.multi_reduction <minimumf>, %90, %cst_33 [1] : vector<16x16xf32> to vector<16xf32>
    %92 = vector.shape_cast %91 : vector<16xf32> to vector<16x1xf32>
    %93 = vector.broadcast %92 : vector<16x1xf32> to vector<16x16xf32>
    %94 = arith.cmpf ole, %90, %93 : vector<16x16xf32>
    %cst_34 = arith.constant 1.600000e+01 : f32
    %95 = vector.broadcast %cst_34 : f32 to vector<16x16xf32>
    %96 = arith.select %94, %6, %95 : vector<16x16xi1>, vector<16x16xf32>
    %cst_35 = arith.constant dense<0x7F800000> : vector<16xf32>
    %97 = vector.multi_reduction <minimumf>, %96, %cst_35 [1] : vector<16x16xf32> to vector<16xf32>
    %98 = vector.shape_cast %97 : vector<16xf32> to vector<16x1xf32>
    %99 = tpu.concatenate %14, %26, %38, %50, %62, %74, %86, %98 in 1 : vector<16x1xf32>, vector<16x1xf32>, vector<16x1xf32>, vector<16x1xf32>, vector<16x1xf32>, vector<16x1xf32>, vector<16x1xf32>, vector<16x1xf32> -> vector<16x8xf32>
    %100 = arith.fptosi %99 : vector<16x8xf32> to vector<16x8xi32>
    %c0_36 = arith.constant 0 : index
    %c0_37 = arith.constant 0 : index
    %c0_38 = arith.constant 0 : index
    %101 = vector.load %arg4[%c0_36, %c0_37, %c0_38] : memref<1x16x8xi32, #tpu.memory_space<vmem>>, vector<1x16x8xi32>
    %102 = vector.shape_cast %101 : vector<1x16x8xi32> to vector<16x8xi32>
    %103 = vector.shape_cast %100 : vector<16x8xi32> to vector<1x16x8xi32>
    tpu.vector_store %arg4[%c0_36, %c0_37, %c0_38], %103 {strides = array<i32>} : memref<1x16x8xi32, #tpu.memory_space<vmem>>, vector<1x16x8xi32>,
    return
  }
  func.func @transform_0(%arg0: i32, %arg1: i32) -> (i32, i32, i32) {
    %c0_i32 = arith.constant 0 : i32
    %c0_i32_0 = arith.constant 0 : i32
    return %arg0, %arg1, %c0_i32 : i32, i32, i32
  }
  func.func @transform_1(%arg0: i32, %arg1: i32) -> (i32, i32, i32) {
    %c0_i32 = arith.constant 0 : i32
    %c0_i32_0 = arith.constant 0 : i32
    %c0_i32_1 = arith.constant 0 : i32
    return %arg0, %c0_i32, %c0_i32_0 : i32, i32, i32
  }
  func.func @transform_2(%arg0: i32, %arg1: i32) -> (i32, i32, i32) {
    %c0_i32 = arith.constant 0 : i32
    %c0_i32_0 = arith.constant 0 : i32
    return %arg0, %arg1, %c0_i32 : i32, i32, i32
  }
}

</mosaic_0001>

<llo_original>
// kernel: tpu_custom_call.1
$region0: #{tpu_custom_call.1}
  #allocation0 [shape = 'u32[]', space=smem, size = 0x4, offset = 0x4, fixed_abs, tag = 'smem constant byte address 0x4 - core index']
  #allocation1 [shape = 'u32[144,128]{1,0:T(1,128)}', space=vmem, size = 0x12000, scoped, tag = 'internal scratch']
  %s0 = inlined_call_operand.vmem [shape: f32[2,16,8], index: 0, kind: input, shape index: {}]
  %s1 = inlined_call_operand.vmem [shape: f32[2,16,8], index: 1, kind: input, shape index: {}]
  %s2 = inlined_call_operand.vmem [shape: s32[2,16,8], index: 2, kind: output, shape index: {}]
  %s3 = sld [smem:[#allocation0]]
  $region41: #{tpu_custom_call.1} parent=0
    _
  %s5 = ssub.s32 1, %s3
  %s6 = scalar_select 0, %s5, %s3
  loop: start=0, step=1, limit=4
  $region2: #{tpu_custom_call.1} parent=0 // loop_pre_header
    _
  $region3: #{tpu_custom_call.1} parent=0 // loop_header
    %s8 = sphi 0, %s12
    %p9 = scmp.ge.s32.totalorder %s8, 4
    %s15 = sphi 0, %s27
    %s16 = sphi 0, %s23
    %s17 = sphi 0, %s15
    %s18 = sphi 0, %s16
    %s19 = sphi 0, %s17
    %s20 = sphi 0, %s18
    %s32 = sphi 0, %s34
    %s35 = sphi 0, %s32
    %s36 = sphi 0, %s35
    %s52 = sphi 0, %s36
    %s58 = sphi 0, %s60
    %s61 = sphi 0, %s58
    %s62 = sphi 0, %s61
    %s78 = sphi 0, %s62
    %s86 = sphi 0, %s88
    %s89 = sphi 0, %s86
    %s90 = sphi 0, %s89
    %s106 = sphi 0, %s90
  $region4: #{tpu_custom_call.1} parent=0 // loop_header_branch
    %11 = sbr.rel (%p9) target = $region8
  $region5: #{tpu_custom_call.1} parent=0 // loop_body
    %s13 = ssub.s32 %s8, 1
    %s14 = ssub.s32 %s8, 2
    %s21 = sadd.s32 1, %s16
    %p22 = scmp.ge.s32.totalorder %s21, 1
    %s23 = scalar_select %p22, 0, %s21
    %s24 = sadd.s32 1, %s15
    %s25 = scalar_select %p22, %s24, %s15
    %p26 = scmp.ge.s32.totalorder %s25, 2
    %s27 = scalar_select %p26, 0, %s25
    %s28 = ssub.s32 %s15, %s27
    %s29 = ssub.s32 %s16, %s23
    %s30 = sor.u32 %s28, %s29
    %p31 = scmp.eq.s32.totalorder %s30, 0
    %s33 = sadd.s32 %s32, 1
    %s34 = scalar_select %p31, %s32, %s33
    %p37 = pneg %p31
    %p38 = scmp.eq.s32.totalorder %s8, 1
    %p39 = por %p37, %p38
    %p40 = scmp.ne.s32.totalorder %s32, %s35
    %p41 = scmp.eq.s32.totalorder %s8, 0
    %p42 = por %p40, %p41
    %p43 = scmp.ne.s32.totalorder %s32, %s35
    %p44 = scmp.eq.s32.totalorder %s13, 1
    %p45 = por %p43, %p44
    %p46 = scmp.ne.s32.totalorder %s35, %s36
    %p47 = scmp.eq.s32.totalorder %s13, 0
    %p48 = por %p46, %p47
    %p49 = scmp.ne.s32.totalorder %s35, %s36
    %p50 = scmp.eq.s32.totalorder %s14, 1
    %p51 = por %p49, %p50
    %p53 = scmp.ne.s32.totalorder %s36, %s52
    %p54 = scmp.eq.s32.totalorder %s14, 0
    %p55 = por %p53, %p54
    %s56 = ssub.s32 %s15, %s27
    %p57 = scmp.eq.s32.totalorder %s56, 0
    %s59 = sadd.s32 %s58, 1
    %s60 = scalar_select %p57, %s58, %s59
    %p63 = pneg %p57
    %p64 = scmp.eq.s32.totalorder %s8, 1
    %p65 = por %p63, %p64
    %p66 = scmp.ne.s32.totalorder %s58, %s61
    %p67 = scmp.eq.s32.totalorder %s8, 0
    %p68 = por %p66, %p67
    %p69 = scmp.ne.s32.totalorder %s58, %s61
    %p70 = scmp.eq.s32.totalorder %s13, 1
    %p71 = por %p69, %p70
    %p72 = scmp.ne.s32.totalorder %s61, %s62
    %p73 = scmp.eq.s32.totalorder %s13, 0
    %p74 = por %p72, %p73
    %p75 = scmp.ne.s32.totalorder %s61, %s62
    %p76 = scmp.eq.s32.totalorder %s14, 1
    %p77 = por %p75, %p76
    %p79 = scmp.ne.s32.totalorder %s62, %s78
    %p80 = scmp.eq.s32.totalorder %s14, 0
    %p81 = por %p79, %p80
    %s82 = ssub.s32 %s15, %s27
    %s83 = ssub.s32 %s16, %s23
    %s84 = sor.u32 %s82, %s83
    %p85 = scmp.eq.s32.totalorder %s84, 0
    %s87 = sadd.s32 %s86, 1
    %s88 = scalar_select %p85, %s86, %s87
    %p91 = pneg %p85
    %p92 = scmp.eq.s32.totalorder %s8, 1
    %p93 = por %p91, %p92
    %p94 = scmp.ne.s32.totalorder %s86, %s89
    %p95 = scmp.eq.s32.totalorder %s8, 0
    %p96 = por %p94, %p95
    %p97 = scmp.ne.s32.totalorder %s86, %s89
    %p98 = scmp.eq.s32.totalorder %s13, 1
    %p99 = por %p97, %p98
    %p100 = scmp.ne.s32.totalorder %s89, %s90
    %p101 = scmp.eq.s32.totalorder %s13, 0
    %p102 = por %p100, %p101
    %p103 = scmp.ne.s32.totalorder %s89, %s90
    %p104 = scmp.eq.s32.totalorder %s14, 1
    %p105 = por %p103, %p104
    %p107 = scmp.ne.s32.totalorder %s90, %s106
    %p108 = scmp.eq.s32.totalorder %s14, 0
    %p109 = por %p107, %p108
    %p110 = scmp.le.s32.totalorder 1, %s8
    %p111 = scmp.lt.s32.totalorder %s8, 3
    %p112 = pnand %p110, %p111
    %p113 = pneg %p112
    // Predicated region
    $region9: #{tpu_custom_call.1} parent=5 // pred_check
      _
    $region10: #{tpu_custom_call.1} parent=5 // pred_check_branch
      %115 = sbr.rel (%p112) target = $region12
    $region11: #{tpu_custom_call.1} parent=5 // pred_region
      %s116 = ssub.s32 %s8, 1
    $region12: #{tpu_custom_call.1} parent=5 // pred_fallthru
      _
    %p117 = scmp.lt.s32.totalorder %s8, 2
    // Predicated region
    $region13: #{tpu_custom_call.1} parent=5 // pred_check
      %p118 = pneg %p117
    $region14: #{tpu_custom_call.1} parent=5 // pred_check_branch
      %120 = sbr.rel (%p118) target = $region16
    $region15: #{tpu_custom_call.1} parent=5 // pred_region
      // Predicated region
      $region17: #{tpu_custom_call.1} parent=15 // pred_check
        %p121 = pneg %p42
      $region18: #{tpu_custom_call.1} parent=15 // pred_check_branch
        %123 = sbr.rel (%p121) target = $region20
      $region19: #{tpu_custom_call.1} parent=15 // pred_region
        %s124 = smul.u32 2, %s16
        %p125 = scmp.lt.s32.totalorder %s15, 1
        %s126 = scalar_select %p125, %s15, 1
        %p127 = scmp.lt.s32.totalorder %s124, 1
        %s128 = scalar_select %p127, %s124, 1
        %s129 = smul.addr %s126, 2
        %s130 = sadd.s32 %s128, %s129
        %s131 = smul.addr %s130, 8
        %s132 = scalar_lea.vmem %s0, %s131
        %s133 = smul.u32 2, %s16
      $region20: #{tpu_custom_call.1} parent=15 // pred_fallthru
        _
      // Predicated region
      $region21: #{tpu_custom_call.1} parent=15 // pred_check
        %p134 = pneg %p68
      $region22: #{tpu_custom_call.1} parent=15 // pred_check_branch
        %136 = sbr.rel (%p134) target = $region24
      $region23: #{tpu_custom_call.1} parent=15 // pred_region
        %p137 = scmp.lt.s32.totalorder %s15, 1
        %s138 = scalar_select %p137, %s15, 1
        %s139 = smul.addr %s138, 2
        %s140 = smul.addr %s139, 8
        %s141 = scalar_lea.vmem %s1, %s140
      $region24: #{tpu_custom_call.1} parent=15 // pred_fallthru
        _
    $region16: #{tpu_custom_call.1} parent=5 // pred_fallthru
      _
    %p142 = scmp.le.s32.totalorder 1, %s8
    %p143 = scmp.lt.s32.totalorder %s8, 3
    %p144 = pnand %p142, %p143
    %p145 = pneg %p144
    // Predicated region
    $region25: #{tpu_custom_call.1} parent=5 // pred_check
      _
    $region26: #{tpu_custom_call.1} parent=5 // pred_check_branch
      %147 = sbr.rel (%p144) target = $region28
    $region27: #{tpu_custom_call.1} parent=5 // pred_region
      %s148 = ssub.s32 %s8, 1
      %s149 = smul.u32 2, %s18
      %p150 = scmp.lt.s32.totalorder %s17, 1
      %s151 = scalar_select %p150, %s17, 1
      %p152 = scmp.lt.s32.totalorder %s149, 1
      %s153 = scalar_select %p152, %s149, 1
      %s154 = smul.addr %s151, 2
      %s155 = sadd.s32 %s153, %s154
      %s156 = smul.addr %s155, 8
      %s157 = scalar_lea.vmem %s0, %s156
      %p158 = pneg %p48
      %p159 = pneg %p45
      %p160 = scmp.lt.s32.totalorder %s17, 1
      %s161 = scalar_select %p160, %s17, 1
      %s162 = smul.addr %s161, 2
      %s163 = smul.addr %s162, 8
      %s164 = scalar_lea.vmem %s1, %s163
      %p165 = pneg %p74
      %p166 = pneg %p71
      %p167 = pneg %p102
      %p168 = pneg %p99
      %s169 = smul.u32 2, %s18
      %p170 = scmp.lt.s32.totalorder %s17, 1
      %s171 = scalar_select %p170, %s17, 1
      %p172 = scmp.lt.s32.totalorder %s169, 1
      %s173 = scalar_select %p172, %s169, 1
      %s174 = smul.addr %s171, 2
      %s175 = sadd.s32 %s173, %s174
      %s176 = smul.addr %s175, 8
      %s177 = scalar_lea.vmem %s2, %s176
      %s178 = smul.u32 2, %s18
      %p179 = scmp.lt.s32.totalorder %s17, 1
      %s180 = scalar_select %p179, %s17, 1
      %p181 = scmp.lt.s32.totalorder %s178, 1
      %s182 = scalar_select %p181, %s178, 1
      %s183 = smul.addr %s180, 2
      %s184 = sadd.s32 %s182, %s183
      %s185 = smul.addr %s184, 8
      %s186 = scalar_lea.vmem %s0, %s185
      %s187 = smul.u32 2, %s18
      %p188 = scmp.lt.s32.totalorder %s17, 1
      %s189 = scalar_select %p188, %s17, 1
      %s190 = smul.addr %s189, 2
      %s191 = smul.addr %s190, 8
      %s192 = scalar_lea.vmem %s1, %s191
      %s193 = smul.u32 2, %s18
      %p194 = scmp.lt.s32.totalorder %s17, 1
      %s195 = scalar_select %p194, %s17, 1
      %p196 = scmp.lt.s32.totalorder %s193, 1
      %s197 = scalar_select %p196, %s193, 1
      %s198 = smul.addr %s195, 2
      %s199 = sadd.s32 %s197, %s198
      %s200 = smul.addr %s199, 8
      %s201 = scalar_lea.vmem %s2, %s200
      %s202 = smul.u32 2, %s18
      %v203 = vld [vmem:[%s186] sm:$0xff]
      %v204 = vld [vmem:[%s186 + $0x8] sm:$0xff]
      %v205 = vld [vmem:[%s192] sm:$0xff]
      %v206 = vld [vmem:[%s192 + $0x8] sm:$0xff]
      %vm207 = vcmask 64512
      %v209 = vsel %vm207, %v203, 0
      %v212 = vsel %vm207, %v204, 0
      %v215 = vsel %vm207, %v205, 0
      %v218 = vsel %vm207, %v206, 0
      %220 = vmatprep.subr.mxu0 0.0
      %221 = vmatpush1.xpose.msra.mxu0 0.0
      %222 = vmatprep.subr.mxu0 0.0
      %223 = vmatpush1.xpose.msra.mxu0 0.0
      %224 = vmatprep.subr.mxu0 0.0
      %225 = vmatpush1.xpose.msra.mxu0 0.0
      %226 = vmatprep.subr.mxu0 0.0
      %227 = vmatpush1.xpose.msra.mxu0 0.0
      %228 = vmatprep.subr.mxu0 0.0
      %229 = vmatpush1.xpose.msra.mxu0 0.0
      %230 = vmatprep.subr.mxu0 0.0
      %231 = vmatpush1.xpose.msra.mxu0 0.0
      %232 = vmatprep.subr.mxu0 0.0
      %233 = vmatpush1.xpose.msra.mxu0 0.0
      %234 = vmatprep.subr.mxu0 0.0
      %235 = vmatpush1.xpose.msra.mxu0 0.0
      %236 = vmatprep.subr.mxu0 0.0
      %237 = vmatpush1.xpose.msra.mxu0 0.0
      %238 = vmatprep.subr.mxu0 0.0
      %239 = vmatpush1.xpose.msra.mxu0 0.0
      %240 = vmatprep.subr.mxu0 0.0
      %241 = vmatpush1.xpose.msra.mxu0 0.0
      %242 = vmatprep.subr.mxu0 0.0
      %243 = vmatpush1.xpose.msra.mxu0 0.0
      %244 = vmatprep.subr.mxu0 0.0
      %245 = vmatpush1.xpose.msra.mxu0 0.0
      %246 = vmatprep.subr.mxu0 0.0
      %247 = vmatpush1.xpose.msra.mxu0 0.0
      %248 = vmatprep.subr.mxu0 0.0
      %v249 = vand.u32 %v218, 4294901760
      %250 = vmatpush1.xpose.msra.mxu0 %v249
      %251 = vmatprep.subr.mxu0 0.0
      %v252 = vand.u32 %v215, 4294901760
      %253 = vmatpush1.xpose.msra.mxu0 %v252
      %254 = vmatprep.subr.mxu0 0.0
      %255 = vmatpush2.xpose.msra.mxu0 0.0
      %256 = vmatprep.subr.mxu0 0.0
      %257 = vmatpush2.xpose.msra.mxu0 0.0
      %258 = vmatprep.subr.mxu0 0.0
      %259 = vmatpush2.xpose.msra.mxu0 0.0
      %260 = vmatprep.subr.mxu0 0.0
      %261 = vmatpush2.xpose.msra.mxu0 0.0
      %262 = vmatprep.subr.mxu0 0.0
      %263 = vmatpush2.xpose.msra.mxu0 0.0
      %264 = vmatprep.subr.mxu0 0.0
      %265 = vmatpush2.xpose.msra.mxu0 0.0
      %266 = vmatprep.subr.mxu0 0.0
      %267 = vmatpush2.xpose.msra.mxu0 0.0
      %268 = vmatprep.subr.mxu0 0.0
      %269 = vmatpush2.xpose.msra.mxu0 0.0
      %270 = vmatprep.subr.mxu0 0.0
      %271 = vmatpush2.xpose.msra.mxu0 0.0
      %272 = vmatprep.subr.mxu0 0.0
      %273 = vmatpush2.xpose.msra.mxu0 0.0
      %274 = vmatprep.subr.mxu0 0.0
      %275 = vmatpush2.xpose.msra.mxu0 0.0
      %276 = vmatprep.subr.mxu0 0.0
      %277 = vmatpush2.xpose.msra.mxu0 0.0
      %278 = vmatprep.subr.mxu0 0.0
      %279 = vmatpush2.xpose.msra.mxu0 0.0
      %280 = vmatprep.subr.mxu0 0.0
      %281 = vmatpush2.xpose.msra.mxu0 0.0
      %282 = vmatprep.subr.mxu0 0.0
      %283 = vmatpush2.xpose.msra.mxu0 0.0
      %284 = vmatprep.subr.mxu0 0.0
      %285 = vmatpush2.xpose.msra.mxu0 0.0
      %286 = vmatprep.mubr.f32.mxu0 0.0
      %v287 = vand.u32 %v209, 4294901760
      %v288 = vsub.f32 %v209, %v287
      %v289 = vand.u32 %v288, 4294901760
      %v290 = vsub.f32 %v288, %v289
      %v291 = vand.u32 %v290, 4294901760
      %292 = vmatmul.mubr.f32.gmra.mxu0 %v291
      %v293 = vpop.f32.mrf.mxu0
      %v294 = vadd.f32 0.0, %v293
      %v295 = vpop.f32.mrf.mxu0
      %296 = vmatprep.mubr.f32.mxu0 0.0
      %v297 = vand.u32 %v212, 4294901760
      %v298 = vsub.f32 %v212, %v297
      %v299 = vand.u32 %v298, 4294901760
      %v300 = vsub.f32 %v298, %v299
      %v301 = vand.u32 %v300, 4294901760
      %302 = vmatmul.mubr.f32.gmra.mxu0 %v301
      %v303 = vpop.f32.mrf.mxu0
      %v304 = vadd.f32 0.0, %v303
      %v305 = vpop.f32.mrf.mxu0
      %306 = vdwg.mxu0
      %307 = vmatprep.subr.mxu0 0.0
      %308 = vmatpush1.xpose.msra.mxu0 0.0
      %309 = vmatprep.subr.mxu0 0.0
      %310 = vmatpush1.xpose.msra.mxu0 0.0
      %311 = vmatprep.subr.mxu0 0.0
      %312 = vmatpush1.xpose.msra.mxu0 0.0
      %313 = vmatprep.subr.mxu0 0.0
      %314 = vmatpush1.xpose.msra.mxu0 0.0
      %315 = vmatprep.subr.mxu0 0.0
      %316 = vmatpush1.xpose.msra.mxu0 0.0
      %317 = vmatprep.subr.mxu0 0.0
      %318 = vmatpush1.xpose.msra.mxu0 0.0
      %319 = vmatprep.subr.mxu0 0.0
      %320 = vmatpush1.xpose.msra.mxu0 0.0
      %321 = vmatprep.subr.mxu0 0.0
      %322 = vmatpush1.xpose.msra.mxu0 0.0
      %323 = vmatprep.subr.mxu0 0.0
      %324 = vmatpush1.xpose.msra.mxu0 0.0
      %325 = vmatprep.subr.mxu0 0.0
      %326 = vmatpush1.xpose.msra.mxu0 0.0
      %327 = vmatprep.subr.mxu0 0.0
      %328 = vmatpush1.xpose.msra.mxu0 0.0
      %329 = vmatprep.subr.mxu0 0.0
      %330 = vmatpush1.xpose.msra.mxu0 0.0
      %331 = vmatprep.subr.mxu0 0.0
      %332 = vmatpush1.xpose.msra.mxu0 0.0
      %333 = vmatprep.subr.mxu0 0.0
      %334 = vmatpush1.xpose.msra.mxu0 0.0
      %335 = vmatprep.subr.mxu0 0.0
      %v336 = vand.u32 %v218, 4294901760
      %v337 = vsub.f32 %v218, %v336
      %v338 = vand.u32 %v337, 4294901760
      %v339 = vsub.f32 %v337, %v338
      %v340 = vand.u32 %v339, 4294901760
      %341 = vmatpush1.xpose.msra.mxu0 %v340
      %342 = vmatprep.subr.mxu0 0.0
      %v343 = vand.u32 %v215, 4294901760
      %v344 = vsub.f32 %v215, %v343
      %v345 = vand.u32 %v344, 4294901760
      %v346 = vsub.f32 %v344, %v345
      %v347 = vand.u32 %v346, 4294901760
      %348 = vmatpush1.xpose.msra.mxu0 %v347
      %349 = vmatprep.subr.mxu0 0.0
      %350 = vmatpush2.xpose.msra.mxu0 0.0
      %351 = vmatprep.subr.mxu0 0.0
      %352 = vmatpush2.xpose.msra.mxu0 0.0
      %353 = vmatprep.subr.mxu0 0.0
      %354 = vmatpush2.xpose.msra.mxu0 0.0
      %355 = vmatprep.subr.mxu0 0.0
      %356 = vmatpush2.xpose.msra.mxu0 0.0
      %357 = vmatprep.subr.mxu0 0.0
      %358 = vmatpush2.xpose.msra.mxu0 0.0
      %359 = vmatprep.subr.mxu0 0.0
      %360 = vmatpush2.xpose.msra.mxu0 0.0
      %361 = vmatprep.subr.mxu0 0.0
      %362 = vmatpush2.xpose.msra.mxu0 0.0
      %363 = vmatprep.subr.mxu0 0.0
      %364 = vmatpush2.xpose.msra.mxu0 0.0
      %365 = vmatprep.subr.mxu0 0.0
      %366 = vmatpush2.xpose.msra.mxu0 0.0
      %367 = vmatprep.subr.mxu0 0.0
      %368 = vmatpush2.xpose.msra.mxu0 0.0
      %369 = vmatprep.subr.mxu0 0.0
      %370 = vmatpush2.xpose.msra.mxu0 0.0
      %371 = vmatprep.subr.mxu0 0.0
      %372 = vmatpush2.xpose.msra.mxu0 0.0
      %373 = vmatprep.subr.mxu0 0.0
      %374 = vmatpush2.xpose.msra.mxu0 0.0
      %375 = vmatprep.subr.mxu0 0.0
      %376 = vmatpush2.xpose.msra.mxu0 0.0
      %377 = vmatprep.subr.mxu0 0.0
      %378 = vmatpush2.xpose.msra.mxu0 0.0
      %379 = vmatprep.subr.mxu0 0.0
      %380 = vmatpush2.xpose.msra.mxu0 0.0
      %381 = vmatprep.mubr.f32.mxu0 0.0
      %v382 = vand.u32 %v209, 4294901760
      %383 = vmatmul.mubr.f32.gmra.mxu0 %v382
      %v384 = vpop.f32.mrf.mxu0
      %v385 = vadd.f32 %v294, %v384
      %v386 = vpop.f32.mrf.mxu0
      %387 = vmatprep.mubr.f32.mxu0 0.0
      %v388 = vand.u32 %v212, 4294901760
      %389 = vmatmul.mubr.f32.gmra.mxu0 %v388
      %v390 = vpop.f32.mrf.mxu0
      %v391 = vadd.f32 %v304, %v390
      %v392 = vpop.f32.mrf.mxu0
      %393 = vdwg.mxu0
      %394 = vmatprep.subr.mxu0 0.0
      %395 = vmatpush1.xpose.msra.mxu0 0.0
      %396 = vmatprep.subr.mxu0 0.0
      %397 = vmatpush1.xpose.msra.mxu0 0.0
      %398 = vmatprep.subr.mxu0 0.0
      %399 = vmatpush1.xpose.msra.mxu0 0.0
      %400 = vmatprep.subr.mxu0 0.0
      %401 = vmatpush1.xpose.msra.mxu0 0.0
      %402 = vmatprep.subr.mxu0 0.0
      %403 = vmatpush1.xpose.msra.mxu0 0.0
      %404 = vmatprep.subr.mxu0 0.0
      %405 = vmatpush1.xpose.msra.mxu0 0.0
      %406 = vmatprep.subr.mxu0 0.0
      %407 = vmatpush1.xpose.msra.mxu0 0.0
      %408 = vmatprep.subr.mxu0 0.0
      %409 = vmatpush1.xpose.msra.mxu0 0.0
      %410 = vmatprep.subr.mxu0 0.0
      %411 = vmatpush1.xpose.msra.mxu0 0.0
      %412 = vmatprep.subr.mxu0 0.0
      %413 = vmatpush1.xpose.msra.mxu0 0.0
      %414 = vmatprep.subr.mxu0 0.0
      %415 = vmatpush1.xpose.msra.mxu0 0.0
      %416 = vmatprep.subr.mxu0 0.0
      %417 = vmatpush1.xpose.msra.mxu0 0.0
      %418 = vmatprep.subr.mxu0 0.0
      %419 = vmatpush1.xpose.msra.mxu0 0.0
      %420 = vmatprep.subr.mxu0 0.0
      %421 = vmatpush1.xpose.msra.mxu0 0.0
      %422 = vmatprep.subr.mxu0 0.0
      %v423 = vand.u32 %v218, 4294901760
      %v424 = vsub.f32 %v218, %v423
      %425 = vmatpush1.xpose.msra.mxu0 %v424
      %426 = vmatprep.subr.mxu0 0.0
      %v427 = vand.u32 %v215, 4294901760
      %v428 = vsub.f32 %v215, %v427
      %429 = vmatpush1.xpose.msra.mxu0 %v428
      %430 = vmatprep.subr.mxu0 0.0
      %431 = vmatpush2.xpose.msra.mxu0 0.0
      %432 = vmatprep.subr.mxu0 0.0
      %433 = vmatpush2.xpose.msra.mxu0 0.0
      %434 = vmatprep.subr.mxu0 0.0
      %435 = vmatpush2.xpose.msra.mxu0 0.0
      %436 = vmatprep.subr.mxu0 0.0
      %437 = vmatpush2.xpose.msra.mxu0 0.0
      %438 = vmatprep.subr.mxu0 0.0
      %439 = vmatpush2.xpose.msra.mxu0 0.0
      %440 = vmatprep.subr.mxu0 0.0
      %441 = vmatpush2.xpose.msra.mxu0 0.0
      %442 = vmatprep.subr.mxu0 0.0
      %443 = vmatpush2.xpose.msra.mxu0 0.0
      %444 = vmatprep.subr.mxu0 0.0
      %445 = vmatpush2.xpose.msra.mxu0 0.0
      %446 = vmatprep.subr.mxu0 0.0
      %447 = vmatpush2.xpose.msra.mxu0 0.0
      %448 = vmatprep.subr.mxu0 0.0
      %449 = vmatpush2.xpose.msra.mxu0 0.0
      %450 = vmatprep.subr.mxu0 0.0
      %451 = vmatpush2.xpose.msra.mxu0 0.0
      %452 = vmatprep.subr.mxu0 0.0
      %453 = vmatpush2.xpose.msra.mxu0 0.0
      %454 = vmatprep.subr.mxu0 0.0
      %455 = vmatpush2.xpose.msra.mxu0 0.0
      %456 = vmatprep.subr.mxu0 0.0
      %457 = vmatpush2.xpose.msra.mxu0 0.0
      %458 = vmatprep.subr.mxu0 0.0
      %459 = vmatpush2.xpose.msra.mxu0 0.0
      %460 = vmatprep.subr.mxu0 0.0
      %461 = vmatpush2.xpose.msra.mxu0 0.0
      %462 = vmatprep.mubr.f32.mxu0 0.0
      %v463 = vand.u32 %v209, 4294901760
      %v464 = vsub.f32 %v209, %v463
      %465 = vmatmul.mubr.f32.gmra.mxu0 %v464
      %v466 = vpop.f32.mrf.mxu0
      %v467 = vadd.f32 %v385, %v466
      %v468 = vpop.f32.mrf.mxu0
      %469 = vmatprep.mubr.f32.mxu0 0.0
      %v470 = vand.u32 %v212, 4294901760
      %v471 = vsub.f32 %v212, %v470
      %472 = vmatmul.mubr.f32.gmra.mxu0 %v471
      %v473 = vpop.f32.mrf.mxu0
      %v474 = vadd.f32 %v391, %v473
      %v475 = vpop.f32.mrf.mxu0
      %476 = vdwg.mxu0
      %477 = vmatprep.subr.mxu0 0.0
      %478 = vmatpush1.xpose.msra.mxu0 0.0
      %479 = vmatprep.subr.mxu0 0.0
      %480 = vmatpush1.xpose.msra.mxu0 0.0
      %481 = vmatprep.subr.mxu0 0.0
      %482 = vmatpush1.xpose.msra.mxu0 0.0
      %483 = vmatprep.subr.mxu0 0.0
      %484 = vmatpush1.xpose.msra.mxu0 0.0
      %485 = vmatprep.subr.mxu0 0.0
      %486 = vmatpush1.xpose.msra.mxu0 0.0
      %487 = vmatprep.subr.mxu0 0.0
      %488 = vmatpush1.xpose.msra.mxu0 0.0
      %489 = vmatprep.subr.mxu0 0.0
      %490 = vmatpush1.xpose.msra.mxu0 0.0
      %491 = vmatprep.subr.mxu0 0.0
      %492 = vmatpush1.xpose.msra.mxu0 0.0
      %493 = vmatprep.subr.mxu0 0.0
      %494 = vmatpush1.xpose.msra.mxu0 0.0
      %495 = vmatprep.subr.mxu0 0.0
      %496 = vmatpush1.xpose.msra.mxu0 0.0
      %497 = vmatprep.subr.mxu0 0.0
      %498 = vmatpush1.xpose.msra.mxu0 0.0
      %499 = vmatprep.subr.mxu0 0.0
      %500 = vmatpush1.xpose.msra.mxu0 0.0
      %501 = vmatprep.subr.mxu0 0.0
      %502 = vmatpush1.xpose.msra.mxu0 0.0
      %503 = vmatprep.subr.mxu0 0.0
      %504 = vmatpush1.xpose.msra.mxu0 0.0
      %505 = vmatprep.subr.mxu0 0.0
      %v506 = vand.u32 %v218, 4294901760
      %507 = vmatpush1.xpose.msra.mxu0 %v506
      %508 = vmatprep.subr.mxu0 0.0
      %v509 = vand.u32 %v215, 4294901760
      %510 = vmatpush1.xpose.msra.mxu0 %v509
      %511 = vmatprep.subr.mxu0 0.0
      %512 = vmatpush2.xpose.msra.mxu0 0.0
      %513 = vmatprep.subr.mxu0 0.0
      %514 = vmatpush2.xpose.msra.mxu0 0.0
      %515 = vmatprep.subr.mxu0 0.0
      %516 = vmatpush2.xpose.msra.mxu0 0.0
      %517 = vmatprep.subr.mxu0 0.0
      %518 = vmatpush2.xpose.msra.mxu0 0.0
      %519 = vmatprep.subr.mxu0 0.0
      %520 = vmatpush2.xpose.msra.mxu0 0.0
      %521 = vmatprep.subr.mxu0 0.0
      %522 = vmatpush2.xpose.msra.mxu0 0.0
      %523 = vmatprep.subr.mxu0 0.0
      %524 = vmatpush2.xpose.msra.mxu0 0.0
      %525 = vmatprep.subr.mxu0 0.0
      %526 = vmatpush2.xpose.msra.mxu0 0.0
      %527 = vmatprep.subr.mxu0 0.0
      %528 = vmatpush2.xpose.msra.mxu0 0.0
      %529 = vmatprep.subr.mxu0 0.0
      %530 = vmatpush2.xpose.msra.mxu0 0.0
      %531 = vmatprep.subr.mxu0 0.0
      %532 = vmatpush2.xpose.msra.mxu0 0.0
      %533 = vmatprep.subr.mxu0 0.0
      %534 = vmatpush2.xpose.msra.mxu0 0.0
      %535 = vmatprep.subr.mxu0 0.0
      %536 = vmatpush2.xpose.msra.mxu0 0.0
      %537 = vmatprep.subr.mxu0 0.0
      %538 = vmatpush2.xpose.msra.mxu0 0.0
      %539 = vmatprep.subr.mxu0 0.0
      %540 = vmatpush2.xpose.msra.mxu0 0.0
      %541 = vmatprep.subr.mxu0 0.0
      %542 = vmatpush2.xpose.msra.mxu0 0.0
      %543 = vmatprep.mubr.f32.mxu0 0.0
      %v544 = vand.u32 %v209, 4294901760
      %v545 = vsub.f32 %v209, %v544
      %v546 = vand.u32 %v545, 4294901760
      %547 = vmatmul.mubr.f32.gmra.mxu0 %v546
      %v548 = vpop.f32.mrf.mxu0
      %v549 = vadd.f32 %v467, %v548
      %v550 = vpop.f32.mrf.mxu0
      %551 = vmatprep.mubr.f32.mxu0 0.0
      %v552 = vand.u32 %v212, 4294901760
      %v553 = vsub.f32 %v212, %v552
      %v554 = vand.u32 %v553, 4294901760
      %555 = vmatmul.mubr.f32.gmra.mxu0 %v554
      %v556 = vpop.f32.mrf.mxu0
      %v557 = vadd.f32 %v474, %v556
      %v558 = vpop.f32.mrf.mxu0
      %559 = vdwg.mxu0
      %560 = vmatprep.subr.mxu0 0.0
      %561 = vmatpush1.xpose.msra.mxu0 0.0
      %562 = vmatprep.subr.mxu0 0.0
      %563 = vmatpush1.xpose.msra.mxu0 0.0
      %564 = vmatprep.subr.mxu0 0.0
      %565 = vmatpush1.xpose.msra.mxu0 0.0
      %566 = vmatprep.subr.mxu0 0.0
      %567 = vmatpush1.xpose.msra.mxu0 0.0
      %568 = vmatprep.subr.mxu0 0.0
      %569 = vmatpush1.xpose.msra.mxu0 0.0
      %570 = vmatprep.subr.mxu0 0.0
      %571 = vmatpush1.xpose.msra.mxu0 0.0
      %572 = vmatprep.subr.mxu0 0.0
      %573 = vmatpush1.xpose.msra.mxu0 0.0
      %574 = vmatprep.subr.mxu0 0.0
      %575 = vmatpush1.xpose.msra.mxu0 0.0
      %576 = vmatprep.subr.mxu0 0.0
      %577 = vmatpush1.xpose.msra.mxu0 0.0
      %578 = vmatprep.subr.mxu0 0.0
      %579 = vmatpush1.xpose.msra.mxu0 0.0
      %580 = vmatprep.subr.mxu0 0.0
      %581 = vmatpush1.xpose.msra.mxu0 0.0
      %582 = vmatprep.subr.mxu0 0.0
      %583 = vmatpush1.xpose.msra.mxu0 0.0
      %584 = vmatprep.subr.mxu0 0.0
      %585 = vmatpush1.xpose.msra.mxu0 0.0
      %586 = vmatprep.subr.mxu0 0.0
      %587 = vmatpush1.xpose.msra.mxu0 0.0
      %588 = vmatprep.subr.mxu0 0.0
      %v589 = vand.u32 %v218, 4294901760
      %v590 = vsub.f32 %v218, %v589
      %v591 = vand.u32 %v590, 4294901760
      %592 = vmatpush1.xpose.msra.mxu0 %v591
      %593 = vmatprep.subr.mxu0 0.0
      %v594 = vand.u32 %v215, 4294901760
      %v595 = vsub.f32 %v215, %v594
      %v596 = vand.u32 %v595, 4294901760
      %597 = vmatpush1.xpose.msra.mxu0 %v596
      %598 = vmatprep.subr.mxu0 0.0
      %599 = vmatpush2.xpose.msra.mxu0 0.0
      %600 = vmatprep.subr.mxu0 0.0
      %601 = vmatpush2.xpose.msra.mxu0 0.0
      %602 = vmatprep.subr.mxu0 0.0
      %603 = vmatpush2.xpose.msra.mxu0 0.0
      %604 = vmatprep.subr.mxu0 0.0
      %605 = vmatpush2.xpose.msra.mxu0 0.0
      %606 = vmatprep.subr.mxu0 0.0
      %607 = vmatpush2.xpose.msra.mxu0 0.0
      %608 = vmatprep.subr.mxu0 0.0
      %609 = vmatpush2.xpose.msra.mxu0 0.0
      %610 = vmatprep.subr.mxu0 0.0
      %611 = vmatpush2.xpose.msra.mxu0 0.0
      %612 = vmatprep.subr.mxu0 0.0
      %613 = vmatpush2.xpose.msra.mxu0 0.0
      %614 = vmatprep.subr.mxu0 0.0
      %615 = vmatpush2.xpose.msra.mxu0 0.0
      %616 = vmatprep.subr.mxu0 0.0
      %617 = vmatpush2.xpose.msra.mxu0 0.0
      %618 = vmatprep.subr.mxu0 0.0
      %619 = vmatpush2.xpose.msra.mxu0 0.0
      %620 = vmatprep.subr.mxu0 0.0
      %621 = vmatpush2.xpose.msra.mxu0 0.0
      %622 = vmatprep.subr.mxu0 0.0
      %623 = vmatpush2.xpose.msra.mxu0 0.0
      %624 = vmatprep.subr.mxu0 0.0
      %625 = vmatpush2.xpose.msra.mxu0 0.0
      %626 = vmatprep.subr.mxu0 0.0
      %627 = vmatpush2.xpose.msra.mxu0 0.0
      %628 = vmatprep.subr.mxu0 0.0
      %629 = vmatpush2.xpose.msra.mxu0 0.0
      %630 = vmatprep.mubr.f32.mxu0 0.0
      %v631 = vand.u32 %v209, 4294901760
      %632 = vmatmul.mubr.f32.gmra.mxu0 %v631
      %v633 = vpop.f32.mrf.mxu0
      %v634 = vadd.f32 %v549, %v633
      %v635 = vpop.f32.mrf.mxu0
      %636 = vmatprep.mubr.f32.mxu0 0.0
      %v637 = vand.u32 %v212, 4294901760
      %638 = vmatmul.mubr.f32.gmra.mxu0 %v637
      %v639 = vpop.f32.mrf.mxu0
      %v640 = vadd.f32 %v557, %v639
      %v641 = vpop.f32.mrf.mxu0
      %642 = vdwg.mxu0
      %643 = vmatprep.subr.mxu0 0.0
      %644 = vmatpush1.xpose.msra.mxu0 0.0
      %645 = vmatprep.subr.mxu0 0.0
      %646 = vmatpush1.xpose.msra.mxu0 0.0
      %647 = vmatprep.subr.mxu0 0.0
      %648 = vmatpush1.xpose.msra.mxu0 0.0
      %649 = vmatprep.subr.mxu0 0.0
      %650 = vmatpush1.xpose.msra.mxu0 0.0
      %651 = vmatprep.subr.mxu0 0.0
      %652 = vmatpush1.xpose.msra.mxu0 0.0
      %653 = vmatprep.subr.mxu0 0.0
      %654 = vmatpush1.xpose.msra.mxu0 0.0
      %655 = vmatprep.subr.mxu0 0.0
      %656 = vmatpush1.xpose.msra.mxu0 0.0
      %657 = vmatprep.subr.mxu0 0.0
      %658 = vmatpush1.xpose.msra.mxu0 0.0
      %659 = vmatprep.subr.mxu0 0.0
      %660 = vmatpush1.xpose.msra.mxu0 0.0
      %661 = vmatprep.subr.mxu0 0.0
      %662 = vmatpush1.xpose.msra.mxu0 0.0
      %663 = vmatprep.subr.mxu0 0.0
      %664 = vmatpush1.xpose.msra.mxu0 0.0
      %665 = vmatprep.subr.mxu0 0.0
      %666 = vmatpush1.xpose.msra.mxu0 0.0
      %667 = vmatprep.subr.mxu0 0.0
      %668 = vmatpush1.xpose.msra.mxu0 0.0
      %669 = vmatprep.subr.mxu0 0.0
      %670 = vmatpush1.xpose.msra.mxu0 0.0
      %671 = vmatprep.subr.mxu0 0.0
      %v672 = vand.u32 %v218, 4294901760
      %673 = vmatpush1.xpose.msra.mxu0 %v672
      %674 = vmatprep.subr.mxu0 0.0
      %v675 = vand.u32 %v215, 4294901760
      %676 = vmatpush1.xpose.msra.mxu0 %v675
      %677 = vmatprep.subr.mxu0 0.0
      %678 = vmatpush2.xpose.msra.mxu0 0.0
      %679 = vmatprep.subr.mxu0 0.0
      %680 = vmatpush2.xpose.msra.mxu0 0.0
      %681 = vmatprep.subr.mxu0 0.0
      %682 = vmatpush2.xpose.msra.mxu0 0.0
      %683 = vmatprep.subr.mxu0 0.0
      %684 = vmatpush2.xpose.msra.mxu0 0.0
      %685 = vmatprep.subr.mxu0 0.0
      %686 = vmatpush2.xpose.msra.mxu0 0.0
      %687 = vmatprep.subr.mxu0 0.0
      %688 = vmatpush2.xpose.msra.mxu0 0.0
      %689 = vmatprep.subr.mxu0 0.0
      %690 = vmatpush2.xpose.msra.mxu0 0.0
      %691 = vmatprep.subr.mxu0 0.0
      %692 = vmatpush2.xpose.msra.mxu0 0.0
      %693 = vmatprep.subr.mxu0 0.0
      %694 = vmatpush2.xpose.msra.mxu0 0.0
      %695 = vmatprep.subr.mxu0 0.0
      %696 = vmatpush2.xpose.msra.mxu0 0.0
      %697 = vmatprep.subr.mxu0 0.0
      %698 = vmatpush2.xpose.msra.mxu0 0.0
      %699 = vmatprep.subr.mxu0 0.0
      %700 = vmatpush2.xpose.msra.mxu0 0.0
      %701 = vmatprep.subr.mxu0 0.0
      %702 = vmatpush2.xpose.msra.mxu0 0.0
      %703 = vmatprep.subr.mxu0 0.0
      %704 = vmatpush2.xpose.msra.mxu0 0.0
      %705 = vmatprep.subr.mxu0 0.0
      %706 = vmatpush2.xpose.msra.mxu0 0.0
      %707 = vmatprep.subr.mxu0 0.0
      %708 = vmatpush2.xpose.msra.mxu0 0.0
      %709 = vmatprep.mubr.f32.mxu0 0.0
      %v710 = vand.u32 %v209, 4294901760
      %711 = vmatmul.mubr.f32.gmra.mxu0 %v710
      %v712 = vpop.f32.mrf.mxu0
      %v713 = vadd.f32 %v634, %v712
      %v714 = vpop.f32.mrf.mxu0
      %715 = vmatprep.mubr.f32.mxu0 0.0
      %v716 = vand.u32 %v212, 4294901760
      %717 = vmatmul.mubr.f32.gmra.mxu0 %v716
      %v718 = vpop.f32.mrf.mxu0
      %v719 = vadd.f32 %v640, %v718
      %v720 = vpop.f32.mrf.mxu0
      %721 = vdwg.mxu0
      %v722 = vlaneseq
      %v723 = vand.u32 %v722, 127
      %v724 = vcvt.s32.f32 %v723
      %vm725 = vcmask 130048
      %v726 = vsel %vm725, %v713, inf
      %727 = vmin.xlane.f32.xlu0 %v726
      %v728 = vpop.xlane.xlu0 %727
      %v729 = vsel %vm725, %v719, inf
      %730 = vmin.xlane.f32.xlu0 %v729
      %v731 = vpop.xlane.xlu0 %730
      %vm732 = vcmp.le.f32.partialorder %v713, %v728
      %vm733 = vcmp.le.f32.partialorder %v719, %v731
      %v734 = vsel %vm732, %v724, 16.0
      %v735 = vsel %vm733, %v724, 16.0
      %v736 = vsel %vm725, %v734, inf
      %737 = vmin.xlane.f32.xlu0 %v736
      %v738 = vpop.xlane.xlu0 %737
      %v739 = vsel %vm725, %v735, inf
      %740 = vmin.xlane.f32.xlu0 %v739
      %v741 = vpop.xlane.xlu0 %740
      %vm742 = vcmp.eq.f32.partialorder %v724, %v738
      %vm743 = vcmp.eq.f32.partialorder %v724, %v741
      %v744 = vsel %vm742, 1e+30, %v713
      %v745 = vsel %vm743, 1e+30, %v719
      %v746 = vsel %vm725, %v744, inf
      %747 = vmin.xlane.f32.xlu0 %v746
      %v748 = vpop.xlane.xlu0 %747
      %v749 = vsel %vm725, %v745, inf
      %750 = vmin.xlane.f32.xlu0 %v749
      %v751 = vpop.xlane.xlu0 %750
      %vm752 = vcmp.le.f32.partialorder %v744, %v748
      %vm753 = vcmp.le.f32.partialorder %v745, %v751
      %v754 = vsel %vm752, %v724, 16.0
      %v755 = vsel %vm753, %v724, 16.0
      %v756 = vsel %vm725, %v754, inf
      %757 = vmin.xlane.f32.xlu0 %v756
      %v758 = vpop.xlane.xlu0 %757
      %v759 = vsel %vm725, %v755, inf
      %760 = vmin.xlane.f32.xlu0 %v759
      %v761 = vpop.xlane.xlu0 %760
      %vm762 = vcmp.eq.f32.partialorder %v724, %v758
      %vm763 = vcmp.eq.f32.partialorder %v724, %v761
      %v764 = vsel %vm762, 1e+30, %v744
      %v765 = vsel %vm763, 1e+30, %v745
      %v766 = vsel %vm725, %v764, inf
      %767 = vmin.xlane.f32.xlu0 %v766
      %v768 = vpop.xlane.xlu0 %767
      %v769 = vsel %vm725, %v765, inf
      %770 = vmin.xlane.f32.xlu0 %v769
      %v771 = vpop.xlane.xlu0 %770
      %vm772 = vcmp.le.f32.partialorder %v764, %v768
      %vm773 = vcmp.le.f32.partialorder %v765, %v771
      %v774 = vsel %vm772, %v724, 16.0
      %v775 = vsel %vm773, %v724, 16.0
      %v776 = vsel %vm725, %v774, inf
      %777 = vmin.xlane.f32.xlu0 %v776
      %v778 = vpop.xlane.xlu0 %777
      %v779 = vsel %vm725, %v775, inf
      %780 = vmin.xlane.f32.xlu0 %v779
      %v781 = vpop.xlane.xlu0 %780
      %vm782 = vcmp.eq.f32.partialorder %v724, %v778
      %vm783 = vcmp.eq.f32.partialorder %v724, %v781
      %v784 = vsel %vm782, 1e+30, %v764
      %v785 = vsel %vm783, 1e+30, %v765
      %v786 = vsel %vm725, %v784, inf
      %787 = vmin.xlane.f32.xlu0 %v786
      %v788 = vpop.xlane.xlu0 %787
      %v789 = vsel %vm725, %v785, inf
      %790 = vmin.xlane.f32.xlu0 %v789
      %v791 = vpop.xlane.xlu0 %790
      %vm792 = vcmp.le.f32.partialorder %v784, %v788
      %vm793 = vcmp.le.f32.partialorder %v785, %v791
      %v794 = vsel %vm792, %v724, 16.0
      %v795 = vsel %vm793, %v724, 16.0
      %v796 = vsel %vm725, %v794, inf
      %797 = vmin.xlane.f32.xlu0 %v796
      %v798 = vpop.xlane.xlu0 %797
      %v799 = vsel %vm725, %v795, inf
      %800 = vmin.xlane.f32.xlu0 %v799
      %v801 = vpop.xlane.xlu0 %800
      %vm802 = vcmp.eq.f32.partialorder %v724, %v798
      %vm803 = vcmp.eq.f32.partialorder %v724, %v801
      %v804 = vsel %vm802, 1e+30, %v784
      %v805 = vsel %vm803, 1e+30, %v785
      %v806 = vsel %vm725, %v804, inf
      %807 = vmin.xlane.f32.xlu0 %v806
      %v808 = vpop.xlane.xlu0 %807
      %v809 = vsel %vm725, %v805, inf
      %810 = vmin.xlane.f32.xlu0 %v809
      %v811 = vpop.xlane.xlu0 %810
      %vm812 = vcmp.le.f32.partialorder %v804, %v808
      %vm813 = vcmp.le.f32.partialorder %v805, %v811
      %v814 = vsel %vm812, %v724, 16.0
      %v815 = vsel %vm813, %v724, 16.0
      %v816 = vsel %vm725, %v814, inf
      %817 = vmin.xlane.f32.xlu0 %v816
      %v818 = vpop.xlane.xlu0 %817
      %v819 = vsel %vm725, %v815, inf
      %820 = vmin.xlane.f32.xlu0 %v819
      %v821 = vpop.xlane.xlu0 %820
      %vm822 = vcmp.eq.f32.partialorder %v724, %v818
      %vm823 = vcmp.eq.f32.partialorder %v724, %v821
      %v824 = vsel %vm822, 1e+30, %v804
      %v825 = vsel %vm823, 1e+30, %v805
      %v826 = vsel %vm725, %v824, inf
      %827 = vmin.xlane.f32.xlu0 %v826
      %v828 = vpop.xlane.xlu0 %827
      %v829 = vsel %vm725, %v825, inf
      %830 = vmin.xlane.f32.xlu0 %v829
      %v831 = vpop.xlane.xlu0 %830
      %vm832 = vcmp.le.f32.partialorder %v824, %v828
      %vm833 = vcmp.le.f32.partialorder %v825, %v831
      %v834 = vsel %vm832, %v724, 16.0
      %v835 = vsel %vm833, %v724, 16.0
      %v836 = vsel %vm725, %v834, inf
      %837 = vmin.xlane.f32.xlu0 %v836
      %v838 = vpop.xlane.xlu0 %837
      %v839 = vsel %vm725, %v835, inf
      %840 = vmin.xlane.f32.xlu0 %v839
      %v841 = vpop.xlane.xlu0 %840
      %vm842 = vcmp.eq.f32.partialorder %v724, %v838
      %vm843 = vcmp.eq.f32.partialorder %v724, %v841
      %v844 = vsel %vm842, 1e+30, %v824
      %v845 = vsel %vm843, 1e+30, %v825
      %v846 = vsel %vm725, %v844, inf
      %847 = vmin.xlane.f32.xlu0 %v846
      %v848 = vpop.xlane.xlu0 %847
      %v849 = vsel %vm725, %v845, inf
      %850 = vmin.xlane.f32.xlu0 %v849
      %v851 = vpop.xlane.xlu0 %850
      %vm852 = vcmp.le.f32.partialorder %v844, %v848
      %vm853 = vcmp.le.f32.partialorder %v845, %v851
      %v854 = vsel %vm852, %v724, 16.0
      %v855 = vsel %vm853, %v724, 16.0
      %v856 = vsel %vm725, %v854, inf
      %857 = vmin.xlane.f32.xlu0 %v856
      %v858 = vpop.xlane.xlu0 %857
      %v859 = vsel %vm725, %v855, inf
      %860 = vmin.xlane.f32.xlu0 %v859
      %v861 = vpop.xlane.xlu0 %860
      %vm862 = vcmp.eq.f32.partialorder %v724, %v858
      %vm863 = vcmp.eq.f32.partialorder %v724, %v861
      %v864 = vsel %vm862, 1e+30, %v844
      %v865 = vsel %vm863, 1e+30, %v845
      %v866 = vsel %vm725, %v864, inf
      %867 = vmin.xlane.f32.xlu0 %v866
      %v868 = vpop.xlane.xlu0 %867
      %v869 = vsel %vm725, %v865, inf
      %870 = vmin.xlane.f32.xlu0 %v869
      %v871 = vpop.xlane.xlu0 %870
      %vm872 = vcmp.le.f32.partialorder %v864, %v868
      %vm873 = vcmp.le.f32.partialorder %v865, %v871
      %v874 = vsel %vm872, %v724, 16.0
      %v875 = vsel %vm873, %v724, 16.0
      %v876 = vsel %vm725, %v874, inf
      %877 = vmin.xlane.f32.xlu0 %v876
      %v878 = vpop.xlane.xlu0 %877
      %v879 = vsel %vm725, %v875, inf
      %880 = vmin.xlane.f32.xlu0 %v879
      %v881 = vpop.xlane.xlu0 %880
      %vm882 = vcmask 7168
      %v883 = vsel %vm882, %v738, %v758
      %v884 = vsel %vm882, %v741, %v761
      %vm885 = vcmask 15360
      %v886 = vsel %vm885, %v883, %v778
      %v887 = vsel %vm885, %v884, %v781
      %vm888 = vcmask 23552
      %v889 = vsel %vm888, %v886, %v798
      %v890 = vsel %vm888, %v887, %v801
      %vm891 = vcmask 31744
      %v892 = vsel %vm891, %v889, %v818
      %v893 = vsel %vm891, %v890, %v821
      %vm894 = vcmask 39936
      %v895 = vsel %vm894, %v892, %v838
      %v896 = vsel %vm894, %v893, %v841
      %vm897 = vcmask 48128
      %v898 = vsel %vm897, %v895, %v858
      %v899 = vsel %vm897, %v896, %v861
      %vm900 = vcmask 56320
      %v901 = vsel %vm900, %v898, %v878
      %v902 = vsel %vm900, %v899, %v881
      %v903 = vcvt.f32.s32.to.zero.pseudo %v901
      %v904 = vcvt.f32.s32.to.zero.pseudo %v902
      %905 = vst.msk [vmem:[%s201] sm:$0xff] %vm207, %v903
      %906 = vst.msk [vmem:[%s201 + $0x8] sm:$0xff] %vm207, %v904
      %s907 = smul.u32 2, %s18
      %p908 = scmp.lt.s32.totalorder %s17, 1
      %s909 = scalar_select %p908, %s17, 1
      %p910 = scmp.lt.s32.totalorder %s907, 1
      %s911 = scalar_select %p910, %s907, 1
      %s912 = smul.addr %s909, 2
      %s913 = sadd.s32 %s911, %s912
      %s914 = smul.addr %s913, 8
      %s915 = scalar_lea.vmem %s2, %s914
      // Predicated region
      $region29: #{tpu_custom_call.1} parent=27 // pred_check
        %p916 = pneg %p99
      $region30: #{tpu_custom_call.1} parent=27 // pred_check_branch
        %918 = sbr.rel (%p916) target = $region32
      $region31: #{tpu_custom_call.1} parent=27 // pred_region
        %s919 = smul.u32 2, %s18
      $region32: #{tpu_custom_call.1} parent=27 // pred_fallthru
        _
    $region28: #{tpu_custom_call.1} parent=5 // pred_fallthru
      _
    %p920 = scmp.le.s32.totalorder 2, %s8
    // Predicated region
    $region33: #{tpu_custom_call.1} parent=5 // pred_check
      %p921 = pneg %p920
    $region34: #{tpu_custom_call.1} parent=5 // pred_check_branch
      %923 = sbr.rel (%p921) target = $region36
    $region35: #{tpu_custom_call.1} parent=5 // pred_region
      %s924 = ssub.s32 %s8, 2
      // Predicated region
      $region37: #{tpu_custom_call.1} parent=35 // pred_check
        %p925 = pneg %p105
      $region38: #{tpu_custom_call.1} parent=35 // pred_check_branch
        %927 = sbr.rel (%p925) target = $region40
      $region39: #{tpu_custom_call.1} parent=35 // pred_region
        %s928 = smul.u32 2, %s20
        %p929 = scmp.lt.s32.totalorder %s19, 1
        %s930 = scalar_select %p929, %s19, 1
        %p931 = scmp.lt.s32.totalorder %s928, 1
        %s932 = scalar_select %p931, %s928, 1
        %s933 = smul.addr %s930, 2
        %s934 = sadd.s32 %s932, %s933
        %s935 = smul.addr %s934, 8
        %s936 = scalar_lea.vmem %s2, %s935
      $region40: #{tpu_custom_call.1} parent=35 // pred_fallthru
        _
    $region36: #{tpu_custom_call.1} parent=5 // pred_fallthru
      _
  $region6: #{tpu_custom_call.1} parent=0 // loop_footer
    %s12 = sadd.s32 1, %s8
  $region7: #{tpu_custom_call.1} parent=0 // loop_footer_branch
    %7 = sbr.rel target = $region3
  $region8: #{tpu_custom_call.1} parent=0 // loop_exit
    _

</llo_original>
